<compile_context>
chip_gen: v7x
topology: tpu7x:2x2x1
jax: 0.10.0
libtpu: 0.0.40
codegen_flags: <defaults>
</compile_context>

<pallas_src>
import functools
import math

import jax
import jax.numpy as jnp
from jax import lax
from jax.experimental import pallas as pl
from jax.experimental.pallas import tpu as pltpu

# v5e/v6e have 128 MiB physical VMEM -> allow bigger linear tiles; keep the
# attention kernel at 32 MiB so it also leaves headroom on v7x (64 MiB / TC).
_LINEAR_VMEM_LIMIT = 64 * 1024 * 1024
_ATTN_VMEM_LIMIT = 32 * 1024 * 1024


def _tile(n: int, preferred: int, multiple: int = 8) -> int:
    """Largest tile <= preferred dividing n, preferring multiples of `multiple`.

    Never returns more than `preferred`, so an awkward n cannot silently make
    the tile the whole axis and blow the VMEM budget.
    """
    if n <= preferred:
        return n
    for t in range(preferred, multiple - 1, -1):
        if n % t == 0 and t % multiple == 0:
            return t
    for t in range(preferred, 0, -1):
        if n % t == 0:
            return t
    return n


# -----------------------------------------------------------------------------
# Linear kernel: y = x @ W + b   (bf16 MXU operands, f32 accumulation, N-tiled)
# -----------------------------------------------------------------------------
def _linear_kernel(x_ref, w_ref, b_ref, o_ref):
    # Cast at the matmul operand only (folded into the MXU operand feed).
    x = x_ref[...].astype(jnp.bfloat16)
    acc = jnp.dot(x, w_ref[...], preferred_element_type=jnp.float32)
    o_ref[...] = (acc + b_ref[...]).astype(o_ref.dtype)


def _linear(x2d, w_bf16, b_f32, *, out_dtype, tm, tn):
    M, cin = x2d.shape
    cout = w_bf16.shape[1]
    return pl.pallas_call(
        _linear_kernel,
        out_shape=jax.ShapeDtypeStruct((M, cout), out_dtype),
        grid_spec=pltpu.PrefetchScalarGridSpec(
            num_scalar_prefetch=0,
            grid=(M // tm, cout // tn),
            in_specs=[
                pl.BlockSpec((tm, cin), lambda i, j: (i, 0)),    # activations
                pl.BlockSpec((cin, tn), lambda i, j: (0, j)),    # weight (bf16, N-tiled)
                pl.BlockSpec((1, tn), lambda i, j: (0, j)),      # bias (f32)
            ],
            out_specs=pl.BlockSpec((tm, tn), lambda i, j: (i, j)),
        ),
        compiler_params=pltpu.CompilerParams(
            dimension_semantics=("parallel", "parallel"),
            vmem_limit_bytes=_LINEAR_VMEM_LIMIT),
    )(x2d, w_bf16, b_f32)


# -----------------------------------------------------------------------------
# Flash-attention kernel (causal), grid = (B*H, q_tiles, kv_tiles)
# -----------------------------------------------------------------------------
def _flash_attn_kernel(q_ref, k_ref, v_ref, o_ref, m_sc, l_sc, acc_sc, *, tq, tk):
    qi = pl.program_id(1)
    ki = pl.program_id(2)

    @pl.when(ki == 0)
    def _():
        m_sc[...] = jnp.full_like(m_sc, -jnp.inf)
        l_sc[...] = jnp.zeros_like(l_sc)
        acc_sc[...] = jnp.zeros_like(acc_sc)

    q_first = qi * tq
    q_last = q_first + (tq - 1)
    k_first = ki * tk
    k_last = k_first + (tk - 1)
    contributes = k_first <= q_last        # some (row, col) has row >= col
    fully_visible = k_last <= q_first      # every (row, col) has row >= col

    def step(needs_mask):
        q = q_ref[0]                       # (tq, hd) bf16 (1/sqrt(hd) pre-folded)
        k = k_ref[0]                       # (tk, hd) bf16
        v = v_ref[0]                       # (tk, hd) bf16

        # q @ k^T: contract last dims of both (canonical TPU NT form; no
        # explicit transpose of the K tile).
        s = lax.dot_general(q, k, (((1,), (1,)), ((), ())),
                            preferred_element_type=jnp.float32)   # (tq, tk) f32
        if needs_mask:
            # Diagonal tile only: broadcasting (tq,1) >= (1,tk) compare, no
            # full (tq,tk) int32 temporaries.
            row = q_first + lax.broadcasted_iota(jnp.int32, (tq, 1), 0)
            col = k_first + lax.broadcasted_iota(jnp.int32, (1, tk), 1)
            s = jnp.where(row >= col, s, jnp.float32(-1e30))

        m_prev = m_sc[...]
        m_new = jnp.maximum(m_prev, jnp.max(s, axis=-1, keepdims=True))
        alpha = jnp.exp(m_prev - m_new)
        p = jnp.exp(s - m_new)
        l_sc[...] = alpha * l_sc[...] + jnp.sum(p, axis=-1, keepdims=True)
        acc_sc[...] = alpha * acc_sc[...] + jnp.dot(
            p.astype(v.dtype), v, preferred_element_type=jnp.float32)
        m_sc[...] = m_new

    # Fully-visible KV tiles skip the mask construction entirely (VALU saving);
    # only partially-visible (diagonal) tiles pay for it.  Tile ki==0 always
    # contributes, so the running max is finite before any rescale matters.
    @pl.when(jnp.logical_and(contributes, fully_visible))
    def _():
        step(needs_mask=False)

    @pl.when(jnp.logical_and(contributes, jnp.logical_not(fully_visible)))
    def _():
        step(needs_mask=True)

    @pl.when(ki == pl.num_programs(2) - 1)
    def _():
        inv_l = pl.reciprocal(l_sc[...], approx=True)
        o_ref[0] = (acc_sc[...] * inv_l).astype(o_ref.dtype)


def _kv_block_index(qi, ki, *, tq, tk):
    # Clamp so causally-skipped KV tiles revisit the previous block index and
    # the pipeline elides their HBM fetch (pl.when already skips compute).
    return jnp.minimum(ki, (qi * tq + tq - 1) // tk)


def _attn_scratch(tq, hd):
    return [
        pltpu.VMEM((tq, 1), jnp.float32),    # running max  m
        pltpu.VMEM((tq, 1), jnp.float32),    # running sum  l
        pltpu.VMEM((tq, hd), jnp.float32),   # output accumulator
    ]


def _flash_attention_split(q, k, v, *, tq, tk):
    """q/k/v: (B*H, T, hd).  Fallback layout for non-lane-aligned head dims."""
    BH, T, hd = q.shape
    kernel = functools.partial(_flash_attn_kernel, tq=tq, tk=tk)
    kv_idx = functools.partial(_kv_block_index, tq=tq, tk=tk)
    return pl.pallas_call(
        kernel,
        out_shape=jax.ShapeDtypeStruct((BH, T, hd), jnp.bfloat16),
        grid_spec=pltpu.PrefetchScalarGridSpec(
            num_scalar_prefetch=0,
            grid=(BH, T // tq, T // tk),
            in_specs=[
                pl.BlockSpec((1, tq, hd), lambda bh, qi, ki: (bh, qi, 0)),
                pl.BlockSpec((1, tk, hd), lambda bh, qi, ki: (bh, kv_idx(qi, ki), 0)),
                pl.BlockSpec((1, tk, hd), lambda bh, qi, ki: (bh, kv_idx(qi, ki), 0)),
            ],
            out_specs=pl.BlockSpec((1, tq, hd), lambda bh, qi, ki: (bh, qi, 0)),
            scratch_shapes=_attn_scratch(tq, hd),
        ),
        compiler_params=pltpu.CompilerParams(
            dimension_semantics=("parallel", "parallel", "arbitrary"),
            vmem_limit_bytes=_ATTN_VMEM_LIMIT),
    )(q, k, v)


def _flash_attention_fused(qkv, H, *, tq, tk):
    """qkv: (B, T, 3C) fused QKV activation.  Direct per-head BlockSpec
    indexing into the fused activation and per-head column writes into a
    (B, T, C) output -- no XLA head-split/merge transposes.
    Requires hd % 128 == 0 (lane-dense blocks)."""
    B, T, C3 = qkv.shape
    C = C3 // 3
    hd = C // H
    kernel = functools.partial(_flash_attn_kernel, tq=tq, tk=tk)
    kv_idx = functools.partial(_kv_block_index, tq=tq, tk=tk)

    def q_map(bh, qi, ki):
        return (bh // H, qi, bh % H)

    def k_map(bh, qi, ki):
        return (bh // H, kv_idx(qi, ki), H + bh % H)

    def v_map(bh, qi, ki):
        return (bh // H, kv_idx(qi, ki), 2 * H + bh % H)

    def o_map(bh, qi, ki):
        return (bh // H, qi, bh % H)

    return pl.pallas_call(
        kernel,
        out_shape=jax.ShapeDtypeStruct((B, T, C), jnp.bfloat16),
        grid_spec=pltpu.PrefetchScalarGridSpec(
            num_scalar_prefetch=0,
            grid=(B * H, T // tq, T // tk),
            in_specs=[
                pl.BlockSpec((1, tq, hd), q_map),
                pl.BlockSpec((1, tk, hd), k_map),
                pl.BlockSpec((1, tk, hd), v_map),
            ],
            out_specs=pl.BlockSpec((1, tq, hd), o_map),
            scratch_shapes=_attn_scratch(tq, hd),
        ),
        compiler_params=pltpu.CompilerParams(
            dimension_semantics=("parallel", "parallel", "arbitrary"),
            vmem_limit_bytes=_ATTN_VMEM_LIMIT),
    )(qkv, qkv, qkv)


# -----------------------------------------------------------------------------
# Module-level wrapper
# -----------------------------------------------------------------------------
def causal_self_attention(x, params, n_head, *, tq=256, tk=256, tm=256, tn=2048):
    """x: (B, T, C) f32. params: nn.Linear-layout (out, in) weights + (out,) biases."""
    B, T, C = x.shape
    assert C % n_head == 0
    hd = C // n_head
    sm_scale = 1.0 / math.sqrt(hd)

    # Host-side weight prep: fused (C, 3C) QKV weight, bf16 MXU operands.
    # nn.Linear stores weight as (out, in); transpose to (in, out) for x @ W.
    # 1/sqrt(hd) folded into Q weight AND bias (zero-cost host transform).
    wqkv = jnp.concatenate(
        [params["wq"].T * sm_scale, params["wk"].T, params["wv"].T],
        axis=1).astype(jnp.bfloat16)
    bqkv = jnp.concatenate(
        [params["bq"] * sm_scale, params["bk"], params["bv"]]
    ).reshape(1, 3 * C).astype(jnp.float32)
    wp = params["wp"].T.astype(jnp.bfloat16)
    bp = params["bp"].reshape(1, C).astype(jnp.float32)

    tm = _tile(B * T, tm, 8)
    tq = _tile(T, tq, 16)          # bf16 sublane packing prefers multiples of 16
    tk = _tile(T, tk, 16)
    tn_qkv = _tile(3 * C, tn, 128)
    tn_out = _tile(C, tn, 128)

    # 1) fused QKV projection (one lane-dense 3C-wide matmul, N-tiled).
    qkv = _linear(x.reshape(B * T, C), wqkv, bqkv,
                  out_dtype=jnp.bfloat16, tm=tm, tn=tn_qkv)

    # 2) flash attention (causal, online softmax).
    if hd % 128 == 0:
        y2d = _flash_attention_fused(
            qkv.reshape(B, T, 3 * C), n_head, tq=tq, tk=tk).reshape(B * T, C)
    else:
        # Small / unaligned head dim: wrapper-side layout plumbing fallback.
        qkv5 = qkv.reshape(B, T, 3, n_head, hd)
        q = qkv5[:, :, 0].transpose(0, 2, 1, 3).reshape(B * n_head, T, hd)
        k = qkv5[:, :, 1].transpose(0, 2, 1, 3).reshape(B * n_head, T, hd)
        v = qkv5[:, :, 2].transpose(0, 2, 1, 3).reshape(B * n_head, T, hd)
        y = _flash_attention_split(q, k, v, tq=tq, tk=tk)
        y2d = y.reshape(B, n_head, T, hd).transpose(0, 2, 1, 3).reshape(B * T, C)

    # 3) output projection.
    out = _linear(y2d, wp, bp, out_dtype=x.dtype, tm=tm, tn=tn_out)
    return out.reshape(B, T, C)


# -----------------------------------------------------------------------------
# Pure-JAX reference mirroring the PyTorch forward (f32 everywhere)
# -----------------------------------------------------------------------------
def _reference(x, params, n_head):
    B, T, C = x.shape
    hd = C // n_head
    scale = 1.0 / math.sqrt(hd)

    def lin(z, w, b):
        return jnp.einsum("btc,oc->bto", z, w) + b

    q = lin(x, params["wq"], params["bq"]).reshape(B, T, n_head, hd).transpose(0, 2, 1, 3)
    k = lin(x, params["wk"], params["bk"]).reshape(B, T, n_head, hd).transpose(0, 2, 1, 3)
    v = lin(x, params["wv"], params["bv"]).reshape(B, T, n_head, hd).transpose(0, 2, 1, 3)

    att = jnp.einsum("bhqd,bhkd->bhqk", q, k) * scale
    mask = jnp.tril(jnp.ones((T, T), dtype=bool))
    att = jnp.where(mask[None, None], att, -jnp.inf)
    att = jax.nn.softmax(att, axis=-1)
    y = jnp.einsum("bhqk,bhkd->bhqd", att, v)
    y = y.transpose(0, 2, 1, 3).reshape(B, T, C)
    return lin(y, params["wp"], params["bp"])


def _make_params(key, C):
    keys = jax.random.split(key, 8)
    names = ["wq", "wk", "wv", "wp", "bq", "bk", "bv", "bp"]
    params = {}
    for i, name in enumerate(names):
        shape = (C, C) if name.startswith("w") else (C,)
        params[name] = jax.random.normal(keys[i], shape, jnp.float32) * 0.02
    return params


def _check(B, T, C, n_head, key):
    kp, kx = jax.random.split(key)
    params = _make_params(kp, C)
    x = jax.random.normal(kx, (B, T, C), jnp.float32)

    out = jax.block_until_ready(causal_self_attention(x, params, n_head))
    ref = _reference(x, params, n_head)
    assert out.shape == (B, T, C)
    max_err = jnp.max(jnp.abs(out - ref))
    # bf16 MXU operands + approx reciprocal => loosened tolerance vs f32 ref.
    assert jnp.allclose(out, ref, atol=2e-2, rtol=2e-2), (
        f"(B={B},T={T},C={C},H={n_head}) max abs err {max_err}")


if __name__ == "__main__":
    key = jax.random.PRNGKey(0)
    k1, k2 = jax.random.split(key)
    # Small head dim (hd=8): exercises the transposed (B*H, T, hd) fallback path.
    _check(B=2, T=8, C=32, n_head=4, key=k1)
    # Lane-aligned head dim (hd=128): exercises the fused direct-BlockSpec path
    # (no head-split/merge transposes).
    _check(B=2, T=8, C=512, n_head=4, key=k2)
    print("KERNEL_OK")
</pallas_src>

<mosaic_0001>
module attributes {stable_mosaic.version = 11 : i64} {
  func.func @_linear_kernel(%arg0: i32, %arg1: i32, %arg2: memref<16x32xf32, #tpu.memory_space<vmem>>, %arg3: memref<32x96xbf16, #tpu.memory_space<vmem>>, %arg4: memref<1x96xf32, #tpu.memory_space<vmem>>, %arg5: memref<16x96xbf16, #tpu.memory_space<vmem>>) attributes {dimension_semantics = [#tpu.dimension_semantics<parallel>, #tpu.dimension_semantics<parallel>], iteration_bounds = array<i64: 1, 1>, scalar_prefetch = 0 : i64, scratch_operands = 0 : i64, tpu.core_type = #tpu.core_type<tc>, window_params = [{transform_indices = @transform_0, window_bounds = array<i64: 16, 32>}, {transform_indices = @transform_1, window_bounds = array<i64: 32, 96>}, {transform_indices = @transform_2, window_bounds = array<i64: 1, 96>}, {transform_indices = @transform_3, window_bounds = array<i64: 16, 96>}]} {
    %c0 = arith.constant 0 : index
    %c0_0 = arith.constant 0 : index
    %0 = vector.load %arg2[%c0, %c0_0] : memref<16x32xf32, #tpu.memory_space<vmem>>, vector<16x32xf32>
    %1 = arith.truncf %0 : vector<16x32xf32> to vector<16x32xbf16>
    %c0_1 = arith.constant 0 : index
    %c0_2 = arith.constant 0 : index
    %2 = vector.load %arg3[%c0_1, %c0_2] : memref<32x96xbf16, #tpu.memory_space<vmem>>, vector<32x96xbf16>
    %cst = arith.constant dense<0.000000e+00> : vector<16x96xf32>
    %3 = tpu.matmul %1, %2, %cst {dimension_numbers = #tpu.dot_dimension_numbers<[1], [0], [0], [1], [0, 0, 1, 1], [], []>} : vector<16x32xbf16>, vector<32x96xbf16>, vector<16x96xf32> -> vector<16x96xf32>
    %c0_3 = arith.constant 0 : index
    %c0_4 = arith.constant 0 : index
    %4 = vector.load %arg4[%c0_3, %c0_4] : memref<1x96xf32, #tpu.memory_space<vmem>>, vector<1x96xf32>
    %5 = vector.broadcast %4 : vector<1x96xf32> to vector<16x96xf32>
    %6 = arith.addf %3, %5 : vector<16x96xf32>
    %7 = arith.truncf %6 : vector<16x96xf32> to vector<16x96xbf16>
    %c0_5 = arith.constant 0 : index
    %c0_6 = arith.constant 0 : index
    %8 = vector.load %arg5[%c0_5, %c0_6] : memref<16x96xbf16, #tpu.memory_space<vmem>>, vector<16x96xbf16>
    tpu.vector_store %arg5[%c0_5, %c0_6], %7 {strides = array<i32>} : memref<16x96xbf16, #tpu.memory_space<vmem>>, vector<16x96xbf16>,
    return
  }
  func.func @transform_0(%arg0: i32, %arg1: i32) -> (i32, i32) {
    %c0_i32 = arith.constant 0 : i32
    %c0_i32_0 = arith.constant 0 : i32
    return %arg0, %c0_i32 : i32, i32
  }
  func.func @transform_1(%arg0: i32, %arg1: i32) -> (i32, i32) {
    %c0_i32 = arith.constant 0 : i32
    %c0_i32_0 = arith.constant 0 : i32
    return %c0_i32, %arg1 : i32, i32
  }
  func.func @transform_2(%arg0: i32, %arg1: i32) -> (i32, i32) {
    %c0_i32 = arith.constant 0 : i32
    %c0_i32_0 = arith.constant 0 : i32
    return %c0_i32, %arg1 : i32, i32
  }
  func.func @transform_3(%arg0: i32, %arg1: i32) -> (i32, i32) {
    %c0_i32 = arith.constant 0 : i32
    return %arg0, %arg1 : i32, i32
  }
}

</mosaic_0001>

<llo_original>
// kernel: tpu_custom_call.1
$region0: #{tpu_custom_call.1}
  #allocation0 [shape = 'u32[]', space=smem, size = 0x4, offset = 0x4, fixed_abs, tag = 'smem constant byte address 0x4 - core index']
  #allocation1 [shape = 'u32[144,128]{1,0:T(1,128)}', space=vmem, size = 0x12000, scoped, tag = 'internal scratch']
  %s0 = inlined_call_operand.hbm [shape: f32[16,32], index: 0, kind: input, shape index: {}]
  %s1 = inlined_call_operand.hbm [shape: bf16[32,96], index: 1, kind: input, shape index: {}]
  %s2 = inlined_call_operand.hbm [shape: f32[1,96], index: 2, kind: input, shape index: {}]
  %s3 = inlined_call_operand.hbm [shape: bf16[16,96], index: 3, kind: output, shape index: {}]
  %s4 = sld [smem:[#allocation0]]
  $region34: #{tpu_custom_call.1} parent=0
    _
  %s6 = ssub.s32 1, %s4
  %s7 = scalar_select 0, %s6, %s4
  $region1: #{tpu_custom_call.1} parent=0
    #allocation2 [shape = 'u8[8192]{0}', space=vmem, size = 0x2000, scoped, tag = 'input window, operand 0, single buffered']
    #allocation3 [shape = 's32[1]{0}', space=sflag, size = 0x4, scoped, tag = 'scoped memory for tpu_custom_call.1']
    #allocation4 [shape = 's32[1]{0}', space=sflag, size = 0x4, scoped, tag = 'scoped memory for tpu_custom_call.1']
    #allocation5 [shape = 'u8[8192]{0}', space=vmem, size = 0x2000, scoped, tag = 'input window, operand 1, single buffered']
    #allocation6 [shape = 's32[1]{0}', space=sflag, size = 0x4, scoped, tag = 'scoped memory for tpu_custom_call.1']
    #allocation7 [shape = 'u8[512]{0}', space=vmem, size = 0x400, scoped, tag = 'input window, operand 2, single buffered']
    #allocation8 [shape = 'u8[4096]{0}', space=vmem, size = 0x1000, scoped, tag = 'output window, operand 0, single buffered']
    %8 = vsyncpa [#allocation3], 0
    %9 = vsyncpa [#allocation6], 0
    %10 = vsyncpa [#allocation4], 0
    // Predicated region
    $region2: #{tpu_custom_call.1} parent=1 // pred_check
      _
    $region3: #{tpu_custom_call.1} parent=1 // pred_check_branch
      %12 = sbr.rel (0) target = $region5
    $region4: #{tpu_custom_call.1} parent=1 // pred_region
      %s14 = ssub.s32 256, 256
      %15 = vsyncadd [#allocation3], %s14
      %s16 = sshll.u32 [#allocation2], 4
      %s17 = int_to_ptr.vmem [resolvable:$true] %s16
      %22 = dma.hbm_to_vmem [thread:$0]  %s0, 256, %s17, [#allocation3], 128, 128, 8
    $region5: #{tpu_custom_call.1} parent=1 // pred_fallthru
      _
    // Predicated region
    $region6: #{tpu_custom_call.1} parent=1 // pred_check
      _
    $region7: #{tpu_custom_call.1} parent=1 // pred_check_branch
      %24 = sbr.rel (0) target = $region9
    $region8: #{tpu_custom_call.1} parent=1 // pred_region
      %s26 = ssub.s32 256, 256
      %27 = vsyncadd [#allocation6], %s26
      %s28 = sshll.u32 [#allocation5], 4
      %s29 = int_to_ptr.vmem [resolvable:$true] %s28
      %34 = dma.hbm_to_vmem [thread:$0]  %s1, 256, %s29, [#allocation6], 64, 64, 4
    $region9: #{tpu_custom_call.1} parent=1 // pred_fallthru
      _
    // Predicated region
    $region10: #{tpu_custom_call.1} parent=1 // pred_check
      _
    $region11: #{tpu_custom_call.1} parent=1 // pred_check_branch
      %36 = sbr.rel (0) target = $region13
    $region12: #{tpu_custom_call.1} parent=1 // pred_region
      %s38 = ssub.s32 16, 16
      %39 = vsyncadd [#allocation6], %s38
      %s41 = sshll.u32 [#allocation7], 4
      %s42 = int_to_ptr.vmem [resolvable:$true] %s41
      %44 = dma.hbm_to_vmem [thread:$0]  %s2, 16, %s42, [#allocation6]
    $region13: #{tpu_custom_call.1} parent=1 // pred_fallthru
      _
    // Predicated region
    $region14: #{tpu_custom_call.1} parent=1 // pred_check
      _
    $region15: #{tpu_custom_call.1} parent=1 // pred_check_branch
      %46 = sbr.rel (0) target = $region17
    $region16: #{tpu_custom_call.1} parent=1 // pred_region
      %47 = dma.done [#allocation3], 256
    $region17: #{tpu_custom_call.1} parent=1 // pred_fallthru
      _
    // Predicated region
    $region18: #{tpu_custom_call.1} parent=1 // pred_check
      _
    $region19: #{tpu_custom_call.1} parent=1 // pred_check_branch
      %49 = sbr.rel (0) target = $region21
    $region20: #{tpu_custom_call.1} parent=1 // pred_region
      %50 = dma.done [#allocation6], 256
    $region21: #{tpu_custom_call.1} parent=1 // pred_fallthru
      _
    // Predicated region
    $region22: #{tpu_custom_call.1} parent=1 // pred_check
      _
    $region23: #{tpu_custom_call.1} parent=1 // pred_check_branch
      %52 = sbr.rel (0) target = $region25
    $region24: #{tpu_custom_call.1} parent=1 // pred_region
      %53 = dma.done [#allocation6], 16
    $region25: #{tpu_custom_call.1} parent=1 // pred_fallthru
      _
    %v55 = vld [vmem:[#allocation2] sm:$0xff]
    %v56 = vld [vmem:[#allocation2 + $0x8] sm:$0xff]
    %v57 = vpack.c.bf16 %v56, %v55
    %v58 = vld [vmem:[#allocation5] sm:$0xf]
    %v59 = vld [vmem:[#allocation5 + $0x4] sm:$0xf]
    %v60 = vld [vmem:[#allocation5 + $0x8] sm:$0xf]
    %v61 = vld [vmem:[#allocation5 + $0xc] sm:$0xf]
    %v62 = vld [vmem:[#allocation7] sm:$0x1]
    %v64 = vlaneseq
    %v65 = vshrl.u32 %v64, 7
    %v66 = vsub.s32 0, %v65
    %v67 = vrot.slane %v62, %v66
    %v73 = vunpack.c.l.b16 %v58
    %v74 = vunpack.c.l.b16 %v59
    %v75 = vunpack.c.l.b16 %v60
    %v76 = vunpack.c.l.b16 %v61
    %v77 = vpack.c.b16 %v74, %v73
    %v78 = vpack.c.b16 %v76, %v75
    %vm81 = vcmask 261120
    %v83 = vsel %vm81, %v57, 0
    %85 = vmatprep.subr.bf16.mxu0 0
    %86 = vmatpush1.bf16.msra.mxu0 %v77
    %87 = vmatprep.subr.bf16.mxu0 0
    %88 = vmatpush1.bf16.msra.mxu0 %v78
    %89 = vmatprep.subr.bf16.mxu0 0
    %90 = vmatpush1.bf16.msra.mxu0 0
    %91 = vmatprep.subr.bf16.mxu0 0
    %92 = vmatpush1.bf16.msra.mxu0 0
    %93 = vmatprep.subr.bf16.mxu0 0
    %94 = vmatpush1.bf16.msra.mxu0 0
    %95 = vmatprep.subr.bf16.mxu0 0
    %96 = vmatpush1.bf16.msra.mxu0 0
    %97 = vmatprep.subr.bf16.mxu0 0
    %98 = vmatpush1.bf16.msra.mxu0 0
    %99 = vmatprep.subr.bf16.mxu0 0
    %100 = vmatpush1.bf16.msra.mxu0 0
    %101 = vmatprep.subr.bf16.mxu0 0
    %102 = vmatpush1.bf16.msra.mxu0 0
    %103 = vmatprep.subr.bf16.mxu0 0
    %104 = vmatpush1.bf16.msra.mxu0 0
    %105 = vmatprep.subr.bf16.mxu0 0
    %106 = vmatpush1.bf16.msra.mxu0 0
    %107 = vmatprep.subr.bf16.mxu0 0
    %108 = vmatpush1.bf16.msra.mxu0 0
    %109 = vmatprep.subr.bf16.mxu0 0
    %110 = vmatpush1.bf16.msra.mxu0 0
    %111 = vmatprep.subr.bf16.mxu0 0
    %112 = vmatpush1.bf16.msra.mxu0 0
    %113 = vmatprep.subr.bf16.mxu0 0
    %114 = vmatpush1.bf16.msra.mxu0 0
    %115 = vmatprep.subr.bf16.mxu0 0
    %116 = vmatpush1.bf16.msra.mxu0 0
    %117 = vmatprep.mubr.bf16.mxu0 0
    %118 = vmatmul.mubr.bf16.gmra.mrb[0].mxu0 %v83
    %v119 = vpop.f32.mrb[0].mxu0
    %v120 = vadd.f32 %v67, %v119
    %v121 = vpop.f32.mrb[0].mxu0
    %v122 = vpop.f32.mrb[0].mxu0
    %v123 = vadd.f32 %v67, %v122
    %v124 = vpop.f32.mrb[0].mxu0
    %125 = vdwg.mxu0
    %v126 = vpack.c.bf16 %v123, %v120
    %v128 = vunpack.c.l.b16 %v126
    %v129 = vunpack.c.h.b16 %v126
    %v130 = vpack.c.b16 %v128, %v128
    %v131 = vpack.c.b16 %v129, %v129
    %vm134 = vcmask 781312
    %135 = vst.msk [vmem:[#allocation8] sm:$0xf] %vm134, %v130
    %136 = vst.msk [vmem:[#allocation8 + $0x4] sm:$0xf] %vm134, %v131
    // Predicated region
    $region26: #{tpu_custom_call.1} parent=1 // pred_check
      _
    $region27: #{tpu_custom_call.1} parent=1 // pred_check_branch
      %138 = sbr.rel (0) target = $region29
    $region28: #{tpu_custom_call.1} parent=1 // pred_region
      %s140 = ssub.s32 128, 128
      %141 = vsyncadd [#allocation4], %s140
      %s142 = sshll.u32 [#allocation8], 4
      %s143 = int_to_ptr.vmem [resolvable:$true] %s142
      %148 = dma.vmem_to_hbm [thread:$0]  %s143, 128, %s3, [#allocation4], 64, 64, 4
    $region29: #{tpu_custom_call.1} parent=1 // pred_fallthru
      _
    // Predicated region
    $region30: #{tpu_custom_call.1} parent=1 // pred_check
      _
    $region31: #{tpu_custom_call.1} parent=1 // pred_check_branch
      %150 = sbr.rel (0) target = $region33
    $region32: #{tpu_custom_call.1} parent=1 // pred_region
      %151 = dma.done [#allocation4], 128
    $region33: #{tpu_custom_call.1} parent=1 // pred_fallthru
      _
    %152 = vsyncpa [#allocation3], 1
    %153 = vsyncpa [#allocation6], 1
    %154 = vsyncpa [#allocation4], 1

</llo_original>
